<compile_context>
chip_gen: v7x
topology: tpu7x:2x2x1
jax: 0.10.0
libtpu: 0.0.40
codegen_flags: <defaults>
</compile_context>

<pallas_src>
import numpy as np

import jax
import jax.numpy as jnp
from jax.experimental import pallas as pl
from jax.experimental.pallas import tpu as pltpu

LANES = 128


def _round_up(n, m):
    return ((n + m - 1) // m) * m


# ---------------------------------------------------------------------------
# Kernel: fused MLP  (x @ W) * scale + shift  [+ ReLU]  for 5 layers.
# ---------------------------------------------------------------------------
def _mlp_kernel(x_ref,
                w1, s1, t1,
                w2, s2, t2,
                w3, s3, t3,
                w4, s4, t4,
                w5t, s5, t5,
                o_ref):
    h = x_ref[...].astype(jnp.float32)

    def affine(h, w_ref, s_ref, t_ref):
        z = jnp.dot(h, w_ref[...], preferred_element_type=jnp.float32)
        return z * s_ref[...] + t_ref[...]

    # layer1 + bn1 + relu   (dropout1: identity in eval)
    h = jnp.maximum(affine(h, w1, s1, t1), 0.0)
    # layer2 + bn2 + relu   (dropout2: identity in eval)
    h = jnp.maximum(affine(h, w2, s2, t2), 0.0)
    # layer3 + bn3 + relu   (dropout3: identity in eval)
    h = jnp.maximum(affine(h, w3, s3, t3), 0.0)
    # layer4 + relu
    h = jnp.maximum(affine(h, w4, s4, t4), 0.0)
    # output: Linear(32 -> 1) as elementwise mul + lane reduction
    z = jnp.sum(h * w5t[...], axis=-1, keepdims=True)
    o_ref[...] = (z * s5[...] + t5[...]).astype(o_ref.dtype)


# ---------------------------------------------------------------------------
# Parameter construction / folding (trace-time, outside the kernel).
# ---------------------------------------------------------------------------
def init_params(key, input_dim, num_clients=5000, embedding_dim=8, bn_eps=1e-5):
    """Random parameters mimicking PyTorch defaults (eval-mode BN stats made
    non-trivial so BN folding is actually exercised)."""
    d0 = (input_dim - 1) + embedding_dim
    layer_dims = [(d0, 256), (256, 128), (128, 64), (64, 32), (32, 1)]
    keys = iter(jax.random.split(key, 32))
    p = {"bn_eps": float(bn_eps)}
    p["embedding"] = jax.random.normal(next(keys), (num_clients, embedding_dim),
                                       jnp.float32)
    for li, (fin, fout) in enumerate(layer_dims, start=1):
        bound = 1.0 / np.sqrt(fin)
        p[f"w{li}"] = jax.random.uniform(next(keys), (fin, fout), jnp.float32,
                                         -bound, bound)
        p[f"b{li}"] = jax.random.uniform(next(keys), (fout,), jnp.float32,
                                         -bound, bound)
    for li, fout in zip((1, 2, 3), (256, 128, 64)):
        p[f"bn{li}_gamma"] = jax.random.uniform(next(keys), (fout,), jnp.float32,
                                                0.5, 1.5)
        p[f"bn{li}_beta"] = 0.1 * jax.random.normal(next(keys), (fout,), jnp.float32)
        p[f"bn{li}_mean"] = 0.1 * jax.random.normal(next(keys), (fout,), jnp.float32)
        p[f"bn{li}_var"] = jax.random.uniform(next(keys), (fout,), jnp.float32,
                                              0.5, 1.5)
    return p


def _fold_params(p):
    """Fold Linear bias + eval-mode BatchNorm into per-layer (W, scale, shift)."""
    eps = p["bn_eps"]
    folded = []
    for li in (1, 2, 3):
        s = p[f"bn{li}_gamma"] / jnp.sqrt(p[f"bn{li}_var"] + eps)
        t = s * p[f"b{li}"] + (p[f"bn{li}_beta"] - p[f"bn{li}_mean"] * s)
        folded.append((p[f"w{li}"], s[None, :], t[None, :]))
    # layer4: no BN
    folded.append((p["w4"], jnp.ones((1, 32), jnp.float32), p["b4"][None, :]))
    # output layer: weight transposed to (1, 32) for the lane reduction
    folded.append((p["w5"].T, jnp.ones((1, 1), jnp.float32), p["b5"][None, :]))
    return folded


# ---------------------------------------------------------------------------
# Forward wrapper (embedding gather + concat in JAX, fused MLP in Pallas).
# ---------------------------------------------------------------------------
def complex_nn_forward(x, params, *, batch_tile=256):
    b, _ = x.shape
    ids = x[:, 0].astype(jnp.int32)
    feats = x[:, 1:].astype(jnp.float32)
    emb = jnp.take(params["embedding"], ids, axis=0)
    h = jnp.concatenate([feats, emb], axis=1)

    d0 = h.shape[1]
    d0p = _round_up(d0, LANES)

    folded = _fold_params(params)
    w1, s1, t1 = folded[0]
    # zero-pad W1 rows to match the zero-padded input columns (exact math)
    folded[0] = (jnp.pad(w1, ((0, d0p - d0), (0, 0))), s1, t1)

    # Large lane-dense batch tiles; pad batch to a multiple of the tile.
    tb = min(batch_tile, _round_up(b, 8))
    bpad = _round_up(b, tb)
    hp = jnp.pad(h, ((0, bpad - b), (0, d0p - d0)))

    flat = [a for tpl in folded for a in tpl]  # 15 weight/scale/shift arrays
    grid = (bpad // tb,)

    in_specs = [pl.BlockSpec((tb, d0p), lambda i: (i, 0))] + [
        pl.BlockSpec(a.shape, lambda i: (0, 0)) for a in flat
    ]

    out = pl.pallas_call(
        _mlp_kernel,
        out_shape=jax.ShapeDtypeStruct((bpad, 1), jnp.float32),
        grid=grid,
        in_specs=in_specs,
        out_specs=pl.BlockSpec((tb, 1), lambda i: (i, 0)),
        compiler_params=pltpu.CompilerParams(
            dimension_semantics=("parallel",)),
    )(hp, *flat)
    return out[:b]


# ---------------------------------------------------------------------------
# Pure-numpy reference (float64), mirroring the PyTorch forward in eval mode.
# ---------------------------------------------------------------------------
def reference_forward(x, params):
    f64 = lambda a: np.asarray(a, dtype=np.float64)
    x = f64(x)
    ids = x[:, 0].astype(np.int64)
    h = np.concatenate([x[:, 1:], f64(params["embedding"])[ids]], axis=1)
    eps = params["bn_eps"]
    for li in (1, 2, 3):
        h = h @ f64(params[f"w{li}"]) + f64(params[f"b{li}"])
        h = (h - f64(params[f"bn{li}_mean"])) / np.sqrt(
            f64(params[f"bn{li}_var"]) + eps)
        h = h * f64(params[f"bn{li}_gamma"]) + f64(params[f"bn{li}_beta"])
        h = np.maximum(h, 0.0)  # dropout: identity in eval
    h = np.maximum(h @ f64(params["w4"]) + f64(params["b4"]), 0.0)
    return h @ f64(params["w5"]) + f64(params["b5"])


if __name__ == "__main__":
    key = jax.random.PRNGKey(0)
    k_ids, k_feat, k_param = jax.random.split(key, 3)

    batch, input_dim, num_clients, embedding_dim = 64, 32, 5000, 8

    ids = jax.random.randint(k_ids, (batch,), 0, num_clients)
    feats = jax.random.normal(k_feat, (batch, input_dim - 1), jnp.float32)
    # x[:, 0] carries the client id (as in the PyTorch module), rest are features.
    x = jnp.concatenate([ids.astype(jnp.float32)[:, None], feats], axis=1)

    params = init_params(k_param, input_dim, num_clients=num_clients,
                         embedding_dim=embedding_dim)

    out = complex_nn_forward(x, params)
    out = jax.block_until_ready(out)

    ref = reference_forward(np.asarray(x), params)
    np.testing.assert_allclose(np.asarray(out), ref, rtol=2e-2, atol=2e-2)
    assert out.shape == (batch, 1)
    print("KERNEL_OK")
</pallas_src>

<mosaic_0001>
module attributes {stable_mosaic.version = 11 : i64} {
  func.func @_mlp_kernel(%arg0: i32, %arg1: memref<64x128xf32, #tpu.memory_space<vmem>>, %arg2: memref<128x256xf32, #tpu.memory_space<vmem>>, %arg3: memref<1x256xf32, #tpu.memory_space<vmem>>, %arg4: memref<1x256xf32, #tpu.memory_space<vmem>>, %arg5: memref<256x128xf32, #tpu.memory_space<vmem>>, %arg6: memref<1x128xf32, #tpu.memory_space<vmem>>, %arg7: memref<1x128xf32, #tpu.memory_space<vmem>>, %arg8: memref<128x64xf32, #tpu.memory_space<vmem>>, %arg9: memref<1x64xf32, #tpu.memory_space<vmem>>, %arg10: memref<1x64xf32, #tpu.memory_space<vmem>>, %arg11: memref<64x32xf32, #tpu.memory_space<vmem>>, %arg12: memref<1x32xf32, #tpu.memory_space<vmem>>, %arg13: memref<1x32xf32, #tpu.memory_space<vmem>>, %arg14: memref<1x32xf32, #tpu.memory_space<vmem>>, %arg15: memref<1x1xf32, #tpu.memory_space<vmem>>, %arg16: memref<1x1xf32, #tpu.memory_space<vmem>>, %arg17: memref<64x1xf32, #tpu.memory_space<vmem>>) attributes {dimension_semantics = [#tpu.dimension_semantics<parallel>], iteration_bounds = array<i64: 1>, scalar_prefetch = 0 : i64, scratch_operands = 0 : i64, tpu.core_type = #tpu.core_type<tc>, window_params = [{transform_indices = @transform_0, window_bounds = array<i64: 64, 128>}, {pipeline_mode = #tpu.pipeline_mode<synchronous>, transform_indices = @transform_1, window_bounds = array<i64: 128, 256>}, {pipeline_mode = #tpu.pipeline_mode<synchronous>, transform_indices = @transform_2, window_bounds = array<i64: 1, 256>}, {pipeline_mode = #tpu.pipeline_mode<synchronous>, transform_indices = @transform_3, window_bounds = array<i64: 1, 256>}, {pipeline_mode = #tpu.pipeline_mode<synchronous>, transform_indices = @transform_4, window_bounds = array<i64: 256, 128>}, {pipeline_mode = #tpu.pipeline_mode<synchronous>, transform_indices = @transform_5, window_bounds = array<i64: 1, 128>}, {pipeline_mode = #tpu.pipeline_mode<synchronous>, transform_indices = @transform_6, window_bounds = array<i64: 1, 128>}, {pipeline_mode = #tpu.pipeline_mode<synchronous>, transform_indices = @transform_7, window_bounds = array<i64: 128, 64>}, {pipeline_mode = #tpu.pipeline_mode<synchronous>, transform_indices = @transform_8, window_bounds = array<i64: 1, 64>}, {pipeline_mode = #tpu.pipeline_mode<synchronous>, transform_indices = @transform_9, window_bounds = array<i64: 1, 64>}, {pipeline_mode = #tpu.pipeline_mode<synchronous>, transform_indices = @transform_10, window_bounds = array<i64: 64, 32>}, {pipeline_mode = #tpu.pipeline_mode<synchronous>, transform_indices = @transform_11, window_bounds = array<i64: 1, 32>}, {pipeline_mode = #tpu.pipeline_mode<synchronous>, transform_indices = @transform_12, window_bounds = array<i64: 1, 32>}, {pipeline_mode = #tpu.pipeline_mode<synchronous>, transform_indices = @transform_13, window_bounds = array<i64: 1, 32>}, {pipeline_mode = #tpu.pipeline_mode<synchronous>, transform_indices = @transform_14, window_bounds = array<i64: 1, 1>}, {pipeline_mode = #tpu.pipeline_mode<synchronous>, transform_indices = @transform_15, window_bounds = array<i64: 1, 1>}, {transform_indices = @transform_16, window_bounds = array<i64: 64, 1>}]} {
    %c0 = arith.constant 0 : index
    %c0_0 = arith.constant 0 : index
    %0 = vector.load %arg1[%c0, %c0_0] : memref<64x128xf32, #tpu.memory_space<vmem>>, vector<64x128xf32>
    %c0_1 = arith.constant 0 : index
    %c0_2 = arith.constant 0 : index
    %1 = vector.load %arg2[%c0_1, %c0_2] : memref<128x256xf32, #tpu.memory_space<vmem>>, vector<128x256xf32>
    %cst = arith.constant dense<0.000000e+00> : vector<64x256xf32>
    %2 = tpu.matmul %0, %1, %cst {dimension_numbers = #tpu.dot_dimension_numbers<[1], [0], [0], [1], [0, 0, 1, 1], [], []>} : vector<64x128xf32>, vector<128x256xf32>, vector<64x256xf32> -> vector<64x256xf32>
    %c0_3 = arith.constant 0 : index
    %c0_4 = arith.constant 0 : index
    %3 = vector.load %arg3[%c0_3, %c0_4] : memref<1x256xf32, #tpu.memory_space<vmem>>, vector<1x256xf32>
    %4 = vector.broadcast %3 : vector<1x256xf32> to vector<64x256xf32>
    %5 = arith.mulf %2, %4 : vector<64x256xf32>
    %c0_5 = arith.constant 0 : index
    %c0_6 = arith.constant 0 : index
    %6 = vector.load %arg4[%c0_5, %c0_6] : memref<1x256xf32, #tpu.memory_space<vmem>>, vector<1x256xf32>
    %7 = vector.broadcast %6 : vector<1x256xf32> to vector<64x256xf32>
    %8 = arith.addf %5, %7 : vector<64x256xf32>
    %cst_7 = arith.constant 0.000000e+00 : f32
    %9 = vector.broadcast %cst_7 : f32 to vector<64x256xf32>
    %10 = arith.maximumf %8, %9 : vector<64x256xf32>
    %c0_8 = arith.constant 0 : index
    %c0_9 = arith.constant 0 : index
    %11 = vector.load %arg5[%c0_8, %c0_9] : memref<256x128xf32, #tpu.memory_space<vmem>>, vector<256x128xf32>
    %cst_10 = arith.constant dense<0.000000e+00> : vector<64x128xf32>
    %12 = tpu.matmul %10, %11, %cst_10 {dimension_numbers = #tpu.dot_dimension_numbers<[1], [0], [0], [1], [0, 0, 1, 1], [], []>} : vector<64x256xf32>, vector<256x128xf32>, vector<64x128xf32> -> vector<64x128xf32>
    %c0_11 = arith.constant 0 : index
    %c0_12 = arith.constant 0 : index
    %13 = vector.load %arg6[%c0_11, %c0_12] : memref<1x128xf32, #tpu.memory_space<vmem>>, vector<1x128xf32>
    %14 = vector.broadcast %13 : vector<1x128xf32> to vector<64x128xf32>
    %15 = arith.mulf %12, %14 : vector<64x128xf32>
    %c0_13 = arith.constant 0 : index
    %c0_14 = arith.constant 0 : index
    %16 = vector.load %arg7[%c0_13, %c0_14] : memref<1x128xf32, #tpu.memory_space<vmem>>, vector<1x128xf32>
    %17 = vector.broadcast %16 : vector<1x128xf32> to vector<64x128xf32>
    %18 = arith.addf %15, %17 : vector<64x128xf32>
    %cst_15 = arith.constant 0.000000e+00 : f32
    %19 = vector.broadcast %cst_15 : f32 to vector<64x128xf32>
    %20 = arith.maximumf %18, %19 : vector<64x128xf32>
    %c0_16 = arith.constant 0 : index
    %c0_17 = arith.constant 0 : index
    %21 = vector.load %arg8[%c0_16, %c0_17] : memref<128x64xf32, #tpu.memory_space<vmem>>, vector<128x64xf32>
    %cst_18 = arith.constant dense<0.000000e+00> : vector<64x64xf32>
    %22 = tpu.matmul %20, %21, %cst_18 {dimension_numbers = #tpu.dot_dimension_numbers<[1], [0], [0], [1], [0, 0, 1, 1], [], []>} : vector<64x128xf32>, vector<128x64xf32>, vector<64x64xf32> -> vector<64x64xf32>
    %c0_19 = arith.constant 0 : index
    %c0_20 = arith.constant 0 : index
    %23 = vector.load %arg9[%c0_19, %c0_20] : memref<1x64xf32, #tpu.memory_space<vmem>>, vector<1x64xf32>
    %24 = vector.broadcast %23 : vector<1x64xf32> to vector<64x64xf32>
    %25 = arith.mulf %22, %24 : vector<64x64xf32>
    %c0_21 = arith.constant 0 : index
    %c0_22 = arith.constant 0 : index
    %26 = vector.load %arg10[%c0_21, %c0_22] : memref<1x64xf32, #tpu.memory_space<vmem>>, vector<1x64xf32>
    %27 = vector.broadcast %26 : vector<1x64xf32> to vector<64x64xf32>
    %28 = arith.addf %25, %27 : vector<64x64xf32>
    %cst_23 = arith.constant 0.000000e+00 : f32
    %29 = vector.broadcast %cst_23 : f32 to vector<64x64xf32>
    %30 = arith.maximumf %28, %29 : vector<64x64xf32>
    %c0_24 = arith.constant 0 : index
    %c0_25 = arith.constant 0 : index
    %31 = vector.load %arg11[%c0_24, %c0_25] : memref<64x32xf32, #tpu.memory_space<vmem>>, vector<64x32xf32>
    %cst_26 = arith.constant dense<0.000000e+00> : vector<64x32xf32>
    %32 = tpu.matmul %30, %31, %cst_26 {dimension_numbers = #tpu.dot_dimension_numbers<[1], [0], [0], [1], [0, 0, 1, 1], [], []>} : vector<64x64xf32>, vector<64x32xf32>, vector<64x32xf32> -> vector<64x32xf32>
    %c0_27 = arith.constant 0 : index
    %c0_28 = arith.constant 0 : index
    %33 = vector.load %arg12[%c0_27, %c0_28] : memref<1x32xf32, #tpu.memory_space<vmem>>, vector<1x32xf32>
    %34 = vector.broadcast %33 : vector<1x32xf32> to vector<64x32xf32>
    %35 = arith.mulf %32, %34 : vector<64x32xf32>
    %c0_29 = arith.constant 0 : index
    %c0_30 = arith.constant 0 : index
    %36 = vector.load %arg13[%c0_29, %c0_30] : memref<1x32xf32, #tpu.memory_space<vmem>>, vector<1x32xf32>
    %37 = vector.broadcast %36 : vector<1x32xf32> to vector<64x32xf32>
    %38 = arith.addf %35, %37 : vector<64x32xf32>
    %cst_31 = arith.constant 0.000000e+00 : f32
    %39 = vector.broadcast %cst_31 : f32 to vector<64x32xf32>
    %40 = arith.maximumf %38, %39 : vector<64x32xf32>
    %c0_32 = arith.constant 0 : index
    %c0_33 = arith.constant 0 : index
    %41 = vector.load %arg14[%c0_32, %c0_33] : memref<1x32xf32, #tpu.memory_space<vmem>>, vector<1x32xf32>
    %42 = vector.broadcast %41 : vector<1x32xf32> to vector<64x32xf32>
    %43 = arith.mulf %40, %42 : vector<64x32xf32>
    %cst_34 = arith.constant dense<0.000000e+00> : vector<64xf32>
    %44 = vector.multi_reduction <add>, %43, %cst_34 [1] : vector<64x32xf32> to vector<64xf32>
    %45 = vector.shape_cast %44 : vector<64xf32> to vector<64x1xf32>
    %c0_35 = arith.constant 0 : index
    %c0_36 = arith.constant 0 : index
    %46 = vector.load %arg15[%c0_35, %c0_36] : memref<1x1xf32, #tpu.memory_space<vmem>>, vector<1x1xf32>
    %47 = vector.broadcast %46 : vector<1x1xf32> to vector<64x1xf32>
    %48 = arith.mulf %45, %47 : vector<64x1xf32>
    %c0_37 = arith.constant 0 : index
    %c0_38 = arith.constant 0 : index
    %49 = vector.load %arg16[%c0_37, %c0_38] : memref<1x1xf32, #tpu.memory_space<vmem>>, vector<1x1xf32>
    %50 = vector.broadcast %49 : vector<1x1xf32> to vector<64x1xf32>
    %51 = arith.addf %48, %50 : vector<64x1xf32>
    %c0_39 = arith.constant 0 : index
    %c0_40 = arith.constant 0 : index
    %52 = vector.load %arg17[%c0_39, %c0_40] : memref<64x1xf32, #tpu.memory_space<vmem>>, vector<64x1xf32>
    tpu.vector_store %arg17[%c0_39, %c0_40], %51 {strides = array<i32>} : memref<64x1xf32, #tpu.memory_space<vmem>>, vector<64x1xf32>,
    return
  }
  func.func @transform_0(%arg0: i32) -> (i32, i32) {
    %c0_i32 = arith.constant 0 : i32
    %c0_i32_0 = arith.constant 0 : i32
    return %arg0, %c0_i32 : i32, i32
  }
  func.func @transform_1(%arg0: i32) -> (i32, i32) {
    %c0_i32 = arith.constant 0 : i32
    %c0_i32_0 = arith.constant 0 : i32
    %c0_i32_1 = arith.constant 0 : i32
    return %c0_i32, %c0_i32_0 : i32, i32
  }
  func.func @transform_2(%arg0: i32) -> (i32, i32) {
    %c0_i32 = arith.constant 0 : i32
    %c0_i32_0 = arith.constant 0 : i32
    %c0_i32_1 = arith.constant 0 : i32
    return %c0_i32, %c0_i32_0 : i32, i32
  }
  func.func @transform_3(%arg0: i32) -> (i32, i32) {
    %c0_i32 = arith.constant 0 : i32
    %c0_i32_0 = arith.constant 0 : i32
    %c0_i32_1 = arith.constant 0 : i32
    return %c0_i32, %c0_i32_0 : i32, i32
  }
  func.func @transform_4(%arg0: i32) -> (i32, i32) {
    %c0_i32 = arith.constant 0 : i32
    %c0_i32_0 = arith.constant 0 : i32
    %c0_i32_1 = arith.constant 0 : i32
    return %c0_i32, %c0_i32_0 : i32, i32
  }
  func.func @transform_5(%arg0: i32) -> (i32, i32) {
    %c0_i32 = arith.constant 0 : i32
    %c0_i32_0 = arith.constant 0 : i32
    %c0_i32_1 = arith.constant 0 : i32
    return %c0_i32, %c0_i32_0 : i32, i32
  }
  func.func @transform_6(%arg0: i32) -> (i32, i32) {
    %c0_i32 = arith.constant 0 : i32
    %c0_i32_0 = arith.constant 0 : i32
    %c0_i32_1 = arith.constant 0 : i32
    return %c0_i32, %c0_i32_0 : i32, i32
  }
  func.func @transform_7(%arg0: i32) -> (i32, i32) {
    %c0_i32 = arith.constant 0 : i32
    %c0_i32_0 = arith.constant 0 : i32
    %c0_i32_1 = arith.constant 0 : i32
    return %c0_i32, %c0_i32_0 : i32, i32
  }
  func.func @transform_8(%arg0: i32) -> (i32, i32) {
    %c0_i32 = arith.constant 0 : i32
    %c0_i32_0 = arith.constant 0 : i32
    %c0_i32_1 = arith.constant 0 : i32
    return %c0_i32, %c0_i32_0 : i32, i32
  }
  func.func @transform_9(%arg0: i32) -> (i32, i32) {
    %c0_i32 = arith.constant 0 : i32
    %c0_i32_0 = arith.constant 0 : i32
    %c0_i32_1 = arith.constant 0 : i32
    return %c0_i32, %c0_i32_0 : i32, i32
  }
  func.func @transform_10(%arg0: i32) -> (i32, i32) {
    %c0_i32 = arith.constant 0 : i32
    %c0_i32_0 = arith.constant 0 : i32
    %c0_i32_1 = arith.constant 0 : i32
    return %c0_i32, %c0_i32_0 : i32, i32
  }
  func.func @transform_11(%arg0: i32) -> (i32, i32) {
    %c0_i32 = arith.constant 0 : i32
    %c0_i32_0 = arith.constant 0 : i32
    %c0_i32_1 = arith.constant 0 : i32
    return %c0_i32, %c0_i32_0 : i32, i32
  }
  func.func @transform_12(%arg0: i32) -> (i32, i32) {
    %c0_i32 = arith.constant 0 : i32
    %c0_i32_0 = arith.constant 0 : i32
    %c0_i32_1 = arith.constant 0 : i32
    return %c0_i32, %c0_i32_0 : i32, i32
  }
  func.func @transform_13(%arg0: i32) -> (i32, i32) {
    %c0_i32 = arith.constant 0 : i32
    %c0_i32_0 = arith.constant 0 : i32
    %c0_i32_1 = arith.constant 0 : i32
    return %c0_i32, %c0_i32_0 : i32, i32
  }
  func.func @transform_14(%arg0: i32) -> (i32, i32) {
    %c0_i32 = arith.constant 0 : i32
    %c0_i32_0 = arith.constant 0 : i32
    %c0_i32_1 = arith.constant 0 : i32
    return %c0_i32, %c0_i32_0 : i32, i32
  }
  func.func @transform_15(%arg0: i32) -> (i32, i32) {
    %c0_i32 = arith.constant 0 : i32
    %c0_i32_0 = arith.constant 0 : i32
    %c0_i32_1 = arith.constant 0 : i32
    return %c0_i32, %c0_i32_0 : i32, i32
  }
  func.func @transform_16(%arg0: i32) -> (i32, i32) {
    %c0_i32 = arith.constant 0 : i32
    %c0_i32_0 = arith.constant 0 : i32
    return %arg0, %c0_i32 : i32, i32
  }
}

</mosaic_0001>

<llo_original>
// kernel: tpu_custom_call.1
$region0: #{tpu_custom_call.1}
  #allocation0 [shape = 'u32[]', space=smem, size = 0x4, offset = 0x4, fixed_abs, tag = 'smem constant byte address 0x4 - core index']
  #allocation1 [shape = 'u32[144,128]{1,0:T(1,128)}', space=vmem, size = 0x12000, scoped, tag = 'internal scratch']
  #allocation2 [shape = 'f32[1,1]{1,0:T(1,128)S(1)}', space=vmem, size = 0x200, scoped, tag = 'scoped memory for tpu_custom_call.1']
  #allocation3 [shape = 'f32[1,1]{1,0:T(1,128)S(1)}', space=vmem, size = 0x200, scoped, tag = 'scoped memory for tpu_custom_call.1']
  %s0 = inlined_call_operand.hbm [shape: f32[64,128], index: 0, kind: input, shape index: {}]
  %s1 = inlined_call_operand.vmem [shape: f32[128,256], index: 1, kind: input, shape index: {}]
  %s2 = inlined_call_operand.vmem [shape: f32[1,256], index: 2, kind: input, shape index: {}]
  %s3 = inlined_call_operand.hbm [shape: f32[1,256], index: 3, kind: input, shape index: {}]
  %s4 = inlined_call_operand.hbm [shape: f32[256,128], index: 4, kind: input, shape index: {}]
  %s5 = inlined_call_operand.hbm [shape: f32[1,128], index: 5, kind: input, shape index: {}]
  %s6 = inlined_call_operand.hbm [shape: f32[1,128], index: 6, kind: input, shape index: {}]
  %s7 = inlined_call_operand.vmem [shape: f32[128,64], index: 7, kind: input, shape index: {}]
  %s8 = inlined_call_operand.vmem [shape: f32[1,64], index: 8, kind: input, shape index: {}]
  %s9 = inlined_call_operand.vmem [shape: f32[1,64], index: 9, kind: input, shape index: {}]
  %s10 = inlined_call_operand.vmem [shape: f32[64,32], index: 10, kind: input, shape index: {}]
  %s11 = inlined_call_operand.vmem [shape: f32[1,32], index: 11, kind: input, shape index: {}]
  %s12 = inlined_call_operand.vmem [shape: f32[1,32], index: 12, kind: input, shape index: {}]
  %s13 = inlined_call_operand.vmem [shape: f32[1,32], index: 13, kind: input, shape index: {}]
  %s14 = inlined_call_operand.<no memory space> [shape: f32[1,1], index: 14, kind: input, shape index: {}]
  %s15 = inlined_call_operand.<no memory space> [shape: f32[1,1], index: 15, kind: input, shape index: {}]
  %s16 = inlined_call_operand.vmem [shape: f32[64,1], index: 16, kind: output, shape index: {}]
  %s17 = sld [smem:[#allocation0]]
  $region94: #{tpu_custom_call.1} parent=0
    _
  %s19 = ssub.s32 1, %s17
  %s20 = scalar_select 0, %s19, %s17
  %v21 = vstv %s14
  %22 = vst [vmem:[#allocation2] sm:$0x1] %v21
  %v23 = vstv %s15
  %24 = vst [vmem:[#allocation3] sm:$0x1] %v23
  $region1: #{tpu_custom_call.1} parent=0
    #allocation4 [shape = 'u8[32768]{0}', space=vmem, size = 0x8000, scoped, tag = 'input window, operand 0, single buffered']
    #allocation5 [shape = 's32[1]{0}', space=sflag, size = 0x4, scoped, tag = 'scoped memory for tpu_custom_call.1']
    #allocation6 [shape = 'u8[1024]{0}', space=vmem, size = 0x400, scoped, tag = 'input window, operand 3, single buffered']
    #allocation7 [shape = 's32[1]{0}', space=sflag, size = 0x4, scoped, tag = 'scoped memory for tpu_custom_call.1']
    #allocation8 [shape = 'u8[131072]{0}', space=vmem, size = 0x20000, scoped, tag = 'input window, operand 4, single buffered']
    #allocation9 [shape = 'u8[512]{0}', space=vmem, size = 0x400, scoped, tag = 'input window, operand 5, single buffered']
    #allocation10 [shape = 's32[1]{0}', space=sflag, size = 0x4, scoped, tag = 'scoped memory for tpu_custom_call.1']
    #allocation11 [shape = 'u8[512]{0}', space=vmem, size = 0x400, scoped, tag = 'input window, operand 6, single buffered']
    %25 = vsyncpa [#allocation5], 0
    %26 = vsyncpa [#allocation7], 0
    %27 = vsyncpa [#allocation10], 0
    // Predicated region
    $region2: #{tpu_custom_call.1} parent=1 // pred_check
      _
    $region3: #{tpu_custom_call.1} parent=1 // pred_check_branch
      %29 = sbr.rel (0) target = $region5
    $region4: #{tpu_custom_call.1} parent=1 // pred_region
      %s31 = ssub.s32 1024, 1024
      %32 = vsyncadd [#allocation5], %s31
      %s33 = sshll.u32 [#allocation4], 4
      %s34 = int_to_ptr.vmem [resolvable:$true] %s33
      %39 = dma.hbm_to_vmem [thread:$0]  %s0, 1024, %s34, [#allocation5], 128, 128, 8
    $region5: #{tpu_custom_call.1} parent=1 // pred_fallthru
      _
    // Predicated region
    $region6: #{tpu_custom_call.1} parent=1 // pred_check
      _
    $region7: #{tpu_custom_call.1} parent=1 // pred_check_branch
      %41 = sbr.rel (0) target = $region9
    $region8: #{tpu_custom_call.1} parent=1 // pred_region
      _
    $region9: #{tpu_custom_call.1} parent=1 // pred_fallthru
      _
    // Predicated region
    $region10: #{tpu_custom_call.1} parent=1 // pred_check
      _
    $region11: #{tpu_custom_call.1} parent=1 // pred_check_branch
      %43 = sbr.rel (0) target = $region13
    $region12: #{tpu_custom_call.1} parent=1 // pred_region
      _
    $region13: #{tpu_custom_call.1} parent=1 // pred_fallthru
      _
    // Predicated region
    $region14: #{tpu_custom_call.1} parent=1 // pred_check
      _
    $region15: #{tpu_custom_call.1} parent=1 // pred_check_branch
      %45 = sbr.rel (0) target = $region17
    $region16: #{tpu_custom_call.1} parent=1 // pred_region
      %s47 = ssub.s32 32, 32
      %48 = vsyncadd [#allocation7], %s47
      %s50 = sshll.u32 [#allocation6], 4
      %s51 = int_to_ptr.vmem [resolvable:$true] %s50
      %53 = dma.hbm_to_vmem [thread:$0]  %s3, 32, %s51, [#allocation7]
    $region17: #{tpu_custom_call.1} parent=1 // pred_fallthru
      _
    // Predicated region
    $region18: #{tpu_custom_call.1} parent=1 // pred_check
      _
    $region19: #{tpu_custom_call.1} parent=1 // pred_check_branch
      %55 = sbr.rel (0) target = $region21
    $region20: #{tpu_custom_call.1} parent=1 // pred_region
      %s57 = ssub.s32 4096, 4096
      %58 = vsyncadd [#allocation7], %s57
      %s59 = sshll.u32 [#allocation8], 4
      %s60 = int_to_ptr.vmem [resolvable:$true] %s59
      %65 = dma.hbm_to_vmem [thread:$0]  %s4, 4096, %s60, [#allocation7], 128, 128, 8
    $region21: #{tpu_custom_call.1} parent=1 // pred_fallthru
      _
    // Predicated region
    $region22: #{tpu_custom_call.1} parent=1 // pred_check
      _
    $region23: #{tpu_custom_call.1} parent=1 // pred_check_branch
      %67 = sbr.rel (0) target = $region25
    $region24: #{tpu_custom_call.1} parent=1 // pred_region
      %s69 = ssub.s32 16, 16
      %70 = vsyncadd [#allocation10], %s69
      %s72 = sshll.u32 [#allocation9], 4
      %s73 = int_to_ptr.vmem [resolvable:$true] %s72
      %75 = dma.hbm_to_vmem [thread:$0]  %s5, 16, %s73, [#allocation10]
    $region25: #{tpu_custom_call.1} parent=1 // pred_fallthru
      _
    // Predicated region
    $region26: #{tpu_custom_call.1} parent=1 // pred_check
      _
    $region27: #{tpu_custom_call.1} parent=1 // pred_check_branch
      %77 = sbr.rel (0) target = $region29
    $region28: #{tpu_custom_call.1} parent=1 // pred_region
      %s79 = ssub.s32 16, 16
      %80 = vsyncadd [#allocation10], %s79
      %s82 = sshll.u32 [#allocation11], 4
      %s83 = int_to_ptr.vmem [resolvable:$true] %s82
      %85 = dma.hbm_to_vmem [thread:$0]  %s6, 16, %s83, [#allocation10]
    $region29: #{tpu_custom_call.1} parent=1 // pred_fallthru
      _
    // Predicated region
    $region30: #{tpu_custom_call.1} parent=1 // pred_check
      _
    $region31: #{tpu_custom_call.1} parent=1 // pred_check_branch
      %87 = sbr.rel (0) target = $region33
    $region32: #{tpu_custom_call.1} parent=1 // pred_region
      _
    $region33: #{tpu_custom_call.1} parent=1 // pred_fallthru
      _
    // Predicated region
    $region34: #{tpu_custom_call.1} parent=1 // pred_check
      _
    $region35: #{tpu_custom_call.1} parent=1 // pred_check_branch
      %89 = sbr.rel (0) target = $region37
    $region36: #{tpu_custom_call.1} parent=1 // pred_region
      _
    $region37: #{tpu_custom_call.1} parent=1 // pred_fallthru
      _
    // Predicated region
    $region38: #{tpu_custom_call.1} parent=1 // pred_check
      _
    $region39: #{tpu_custom_call.1} parent=1 // pred_check_branch
      %91 = sbr.rel (0) target = $region41
    $region40: #{tpu_custom_call.1} parent=1 // pred_region
      _
    $region41: #{tpu_custom_call.1} parent=1 // pred_fallthru
      _
    // Predicated region
    $region42: #{tpu_custom_call.1} parent=1 // pred_check
      _
    $region43: #{tpu_custom_call.1} parent=1 // pred_check_branch
      %93 = sbr.rel (0) target = $region45
    $region44: #{tpu_custom_call.1} parent=1 // pred_region
      _
    $region45: #{tpu_custom_call.1} parent=1 // pred_fallthru
      _
    // Predicated region
    $region46: #{tpu_custom_call.1} parent=1 // pred_check
      _
    $region47: #{tpu_custom_call.1} parent=1 // pred_check_branch
      %95 = sbr.rel (0) target = $region49
    $region48: #{tpu_custom_call.1} parent=1 // pred_region
      _
    $region49: #{tpu_custom_call.1} parent=1 // pred_fallthru
      _
    // Predicated region
    $region50: #{tpu_custom_call.1} parent=1 // pred_check
      _
    $region51: #{tpu_custom_call.1} parent=1 // pred_check_branch
      %97 = sbr.rel (0) target = $region53
    $region52: #{tpu_custom_call.1} parent=1 // pred_region
      _
    $region53: #{tpu_custom_call.1} parent=1 // pred_fallthru
      _
    // Predicated region
    $region54: #{tpu_custom_call.1} parent=1 // pred_check
      _
    $region55: #{tpu_custom_call.1} parent=1 // pred_check_branch
      %99 = sbr.rel (0) target = $region57
    $region56: #{tpu_custom_call.1} parent=1 // pred_region
      _
    $region57: #{tpu_custom_call.1} parent=1 // pred_fallthru
      _
    // Predicated region
    $region58: #{tpu_custom_call.1} parent=1 // pred_check
      _
    $region59: #{tpu_custom_call.1} parent=1 // pred_check_branch
      %101 = sbr.rel (0) target = $region61
    $region60: #{tpu_custom_call.1} parent=1 // pred_region
      _
    $region61: #{tpu_custom_call.1} parent=1 // pred_fallthru
      _
    // Predicated region
    $region62: #{tpu_custom_call.1} parent=1 // pred_check
      _
    $region63: #{tpu_custom_call.1} parent=1 // pred_check_branch
      %103 = sbr.rel (0) target = $region65
    $region64: #{tpu_custom_call.1} parent=1 // pred_region
      _
    $region65: #{tpu_custom_call.1} parent=1 // pred_fallthru
      _
    // Predicated region
    $region66: #{tpu_custom_call.1} parent=1 // pred_check
      _
    $region67: #{tpu_custom_call.1} parent=1 // pred_check_branch
      %105 = sbr.rel (0) target = $region69
    $region68: #{tpu_custom_call.1} parent=1 // pred_region
      %106 = dma.done [#allocation5], 1024
    $region69: #{tpu_custom_call.1} parent=1 // pred_fallthru
      _
    // Predicated region
    $region70: #{tpu_custom_call.1} parent=1 // pred_check
      _
    $region71: #{tpu_custom_call.1} parent=1 // pred_check_branch
      %108 = sbr.rel (0) target = $region73
    $region72: #{tpu_custom_call.1} parent=1 // pred_region
      %109 = dma.done [#allocation7], 32
    $region73: #{tpu_custom_call.1} parent=1 // pred_fallthru
      _
    // Predicated region
    $region74: #{tpu_custom_call.1} parent=1 // pred_check
      _
    $region75: #{tpu_custom_call.1} parent=1 // pred_check_branch
      %111 = sbr.rel (0) target = $region77
    $region76: #{tpu_custom_call.1} parent=1 // pred_region
      %112 = dma.done [#allocation7], 4096
    $region77: #{tpu_custom_call.1} parent=1 // pred_fallthru
      _
    // Predicated region
    $region78: #{tpu_custom_call.1} parent=1 // pred_check
      _
    $region79: #{tpu_custom_call.1} parent=1 // pred_check_branch
      %114 = sbr.rel (0) target = $region81
    $region80: #{tpu_custom_call.1} parent=1 // pred_region
      %115 = dma.done [#allocation10], 16
    $region81: #{tpu_custom_call.1} parent=1 // pred_fallthru
      _
    // Predicated region
    $region82: #{tpu_custom_call.1} parent=1 // pred_check
      _
    $region83: #{tpu_custom_call.1} parent=1 // pred_check_branch
      %117 = sbr.rel (0) target = $region85
    $region84: #{tpu_custom_call.1} parent=1 // pred_region
      %118 = dma.done [#allocation10], 16
    $region85: #{tpu_custom_call.1} parent=1 // pred_fallthru
      _
    %v119 = vld [vmem:[#allocation4] sm:$0xff]
    %v120 = vld [vmem:[#allocation4 + $0x8] sm:$0xff]
    %v121 = vld [vmem:[#allocation4 + $0x10] sm:$0xff]
    %v122 = vld [vmem:[#allocation4 + $0x18] sm:$0xff]
    %v123 = vld [vmem:[#allocation4 + $0x20] sm:$0xff]
    %v124 = vld [vmem:[#allocation4 + $0x28] sm:$0xff]
    %v125 = vld [vmem:[#allocation4 + $0x30] sm:$0xff]
    %v126 = vld [vmem:[#allocation4 + $0x38] sm:$0xff]
    %v127 = vld [vmem:[%s1] sm:$0xff]
    %v128 = vld [vmem:[%s1 + $0x8] sm:$0xff]
    %v129 = vld [vmem:[%s1 + $0x10] sm:$0xff]
    %v130 = vld [vmem:[%s1 + $0x18] sm:$0xff]
    %v131 = vld [vmem:[%s1 + $0x20] sm:$0xff]
    %v132 = vld [vmem:[%s1 + $0x28] sm:$0xff]
    %v133 = vld [vmem:[%s1 + $0x30] sm:$0xff]
    %v134 = vld [vmem:[%s1 + $0x38] sm:$0xff]
    %v135 = vld [vmem:[%s1 + $0x40] sm:$0xff]
    %v136 = vld [vmem:[%s1 + $0x48] sm:$0xff]
    %v137 = vld [vmem:[%s1 + $0x50] sm:$0xff]
    %v138 = vld [vmem:[%s1 + $0x58] sm:$0xff]
    %v139 = vld [vmem:[%s1 + $0x60] sm:$0xff]
    %v140 = vld [vmem:[%s1 + $0x68] sm:$0xff]
    %v141 = vld [vmem:[%s1 + $0x70] sm:$0xff]
    %v142 = vld [vmem:[%s1 + $0x78] sm:$0xff]
    %v143 = vld [vmem:[%s1 + $0x80] sm:$0xff]
    %v144 = vld [vmem:[%s1 + $0x88] sm:$0xff]
    %v145 = vld [vmem:[%s1 + $0x90] sm:$0xff]
    %v146 = vld [vmem:[%s1 + $0x98] sm:$0xff]
    %v147 = vld [vmem:[%s1 + $0xa0] sm:$0xff]
    %v148 = vld [vmem:[%s1 + $0xa8] sm:$0xff]
    %v149 = vld [vmem:[%s1 + $0xb0] sm:$0xff]
    %v150 = vld [vmem:[%s1 + $0xb8] sm:$0xff]
    %v151 = vld [vmem:[%s1 + $0xc0] sm:$0xff]
    %v152 = vld [vmem:[%s1 + $0xc8] sm:$0xff]
    %v153 = vld [vmem:[%s1 + $0xd0] sm:$0xff]
    %v154 = vld [vmem:[%s1 + $0xd8] sm:$0xff]
    %v155 = vld [vmem:[%s1 + $0xe0] sm:$0xff]
    %v156 = vld [vmem:[%s1 + $0xe8] sm:$0xff]
    %v157 = vld [vmem:[%s1 + $0xf0] sm:$0xff]
    %v158 = vld [vmem:[%s1 + $0xf8] sm:$0xff]
    %159 = vmatprep.subr.mxu0 %v128
    %160 = vmatpush1.msra.mxu0 %v127
    %161 = vmatprep.subr.mxu0 %v130
    %162 = vmatpush1.msra.mxu0 %v129
    %163 = vmatprep.subr.mxu0 %v132
    %164 = vmatpush1.msra.mxu0 %v131
    %165 = vmatprep.subr.mxu0 %v134
    %166 = vmatpush1.msra.mxu0 %v133
    %167 = vmatprep.subr.mxu0 %v136
    %168 = vmatpush1.msra.mxu0 %v135
    %169 = vmatprep.subr.mxu0 %v138
    %170 = vmatpush1.msra.mxu0 %v137
    %171 = vmatprep.subr.mxu0 %v140
    %172 = vmatpush1.msra.mxu0 %v139
    %173 = vmatprep.subr.mxu0 %v142
    %174 = vmatpush1.msra.mxu0 %v141
    %175 = vmatprep.subr.mxu0 %v144
    %176 = vmatpush1.msra.mxu0 %v143
    %177 = vmatprep.subr.mxu0 %v146
    %178 = vmatpush1.msra.mxu0 %v145
    %179 = vmatprep.subr.mxu0 %v148
    %180 = vmatpush1.msra.mxu0 %v147
    %181 = vmatprep.subr.mxu0 %v150
    %182 = vmatpush1.msra.mxu0 %v149
    %183 = vmatprep.subr.mxu0 %v152
    %184 = vmatpush1.msra.mxu0 %v151
    %185 = vmatprep.subr.mxu0 %v154
    %186 = vmatpush1.msra.mxu0 %v153
    %187 = vmatprep.subr.mxu0 %v156
    %188 = vmatpush1.msra.mxu0 %v155
    %189 = vmatprep.subr.mxu0 %v158
    %190 = vmatpush1.msra.mxu0 %v157
    %191 = vmatprep.subr.mxu0 0.0
    %192 = vmatpush1.msra.mxu0 0.0
    %193 = vmatprep.subr.mxu0 0.0
    %194 = vmatpush1.msra.mxu0 0.0
    %195 = vmatprep.subr.mxu0 0.0
    %196 = vmatpush1.msra.mxu0 0.0
    %197 = vmatprep.subr.mxu0 0.0
    %198 = vmatpush1.msra.mxu0 0.0
    %199 = vmatprep.subr.mxu0 0.0
    %200 = vmatpush1.msra.mxu0 0.0
    %201 = vmatprep.subr.mxu0 0.0
    %202 = vmatpush1.msra.mxu0 0.0
    %203 = vmatprep.subr.mxu0 0.0
    %204 = vmatpush1.msra.mxu0 0.0
    %205 = vmatprep.subr.mxu0 0.0
    %206 = vmatpush1.msra.mxu0 0.0
    %207 = vmatprep.subr.mxu0 0.0
    %208 = vmatpush1.msra.mxu0 0.0
    %209 = vmatprep.subr.mxu0 0.0
    %210 = vmatpush1.msra.mxu0 0.0
    %211 = vmatprep.subr.mxu0 0.0
    %212 = vmatpush1.msra.mxu0 0.0
    %213 = vmatprep.subr.mxu0 0.0
    %214 = vmatpush1.msra.mxu0 0.0
    %215 = vmatprep.subr.mxu0 0.0
    %216 = vmatpush1.msra.mxu0 0.0
    %217 = vmatprep.subr.mxu0 0.0
    %218 = vmatpush1.msra.mxu0 0.0
    %219 = vmatprep.subr.mxu0 0.0
    %220 = vmatpush1.msra.mxu0 0.0
    %221 = vmatprep.subr.mxu0 0.0
    %222 = vmatpush1.msra.mxu0 0.0
    %223 = vmatprep.mubr.f32.mxu0 0.0
    %224 = vmatmul.mubr.f32.gmra.mrb[0].mxu0 %v119
    %v225 = vpop.f32.mrb[0].mxu0
    %v226 = vadd.f32 0.0, %v225
    %v227 = vpop.f32.mrb[0].mxu0
    %v228 = vadd.f32 0.0, %v227
    %229 = vmatprep.mubr.f32.mxu0 0.0
    %230 = vmatmul.mubr.f32.gmra.mrb[0].mxu0 %v120
    %v231 = vpop.f32.mrb[0].mxu0
    %v232 = vadd.f32 0.0, %v231
    %v233 = vpop.f32.mrb[0].mxu0
    %v234 = vadd.f32 0.0, %v233
    %235 = vmatprep.mubr.f32.mxu0 0.0
    %236 = vmatmul.mubr.f32.gmra.mrb[0].mxu0 %v121
    %v237 = vpop.f32.mrb[0].mxu0
    %v238 = vadd.f32 0.0, %v237
    %v239 = vpop.f32.mrb[0].mxu0
    %v240 = vadd.f32 0.0, %v239
    %241 = vmatprep.mubr.f32.mxu0 0.0
    %242 = vmatmul.mubr.f32.gmra.mrb[0].mxu0 %v122
    %v243 = vpop.f32.mrb[0].mxu0
    %v244 = vadd.f32 0.0, %v243
    %v245 = vpop.f32.mrb[0].mxu0
    %v246 = vadd.f32 0.0, %v245
    %247 = vmatprep.mubr.f32.mxu0 0.0
    %248 = vmatmul.mubr.f32.gmra.mrb[0].mxu0 %v123
    %v249 = vpop.f32.mrb[0].mxu0
    %v250 = vadd.f32 0.0, %v249
    %v251 = vpop.f32.mrb[0].mxu0
    %v252 = vadd.f32 0.0, %v251
    %253 = vmatprep.mubr.f32.mxu0 0.0
    %254 = vmatmul.mubr.f32.gmra.mrb[0].mxu0 %v124
    %v255 = vpop.f32.mrb[0].mxu0
    %v256 = vadd.f32 0.0, %v255
    %v257 = vpop.f32.mrb[0].mxu0
    %v258 = vadd.f32 0.0, %v257
    %259 = vmatprep.mubr.f32.mxu0 0.0
    %260 = vmatmul.mubr.f32.gmra.mrb[0].mxu0 %v125
    %v261 = vpop.f32.mrb[0].mxu0
    %v262 = vadd.f32 0.0, %v261
    %v263 = vpop.f32.mrb[0].mxu0
    %v264 = vadd.f32 0.0, %v263
    %265 = vmatprep.mubr.f32.mxu0 0.0
    %266 = vmatmul.mubr.f32.gmra.mrb[0].mxu0 %v126
    %v267 = vpop.f32.mrb[0].mxu0
    %v268 = vadd.f32 0.0, %v267
    %v269 = vpop.f32.mrb[0].mxu0
    %v270 = vadd.f32 0.0, %v269
    %271 = vdwg.mxu0
    %v272 = vld [vmem:[%s2] sm:$0x3]
    %v274 = vlaneseq
    %v275 = vshrl.u32 %v274, 7
    %v276 = vsub.s32 0, %v275
    %v277 = vrot.slane %v272, %v276
    %v278 = vlaneseq
    %v279 = vshrl.u32 %v278, 7
    %v280 = vsub.s32 1, %v279
    %v281 = vrot.slane %v272, %v280
    %v284 = vmul.f32 %v226, %v277
    %v285 = vmul.f32 %v228, %v281
    %v286 = vmul.f32 %v232, %v277
    %v287 = vmul.f32 %v234, %v281
    %v288 = vmul.f32 %v238, %v277
    %v289 = vmul.f32 %v240, %v281
    %v290 = vmul.f32 %v244, %v277
    %v291 = vmul.f32 %v246, %v281
    %v292 = vmul.f32 %v250, %v277
    %v293 = vmul.f32 %v252, %v281
    %v294 = vmul.f32 %v256, %v277
    %v295 = vmul.f32 %v258, %v281
    %v296 = vmul.f32 %v262, %v277
    %v297 = vmul.f32 %v264, %v281
    %v298 = vmul.f32 %v268, %v277
    %v299 = vmul.f32 %v270, %v281
    %v300 = vld [vmem:[#allocation6] sm:$0x3]
    %v302 = vlaneseq
    %v303 = vshrl.u32 %v302, 7
    %v304 = vsub.s32 0, %v303
    %v305 = vrot.slane %v300, %v304
    %v306 = vlaneseq
    %v307 = vshrl.u32 %v306, 7
    %v308 = vsub.s32 1, %v307
    %v309 = vrot.slane %v300, %v308
    %v312 = vadd.f32 %v284, %v305
    %v313 = vadd.f32 %v285, %v309
    %v314 = vadd.f32 %v286, %v305
    %v315 = vadd.f32 %v287, %v309
    %v316 = vadd.f32 %v288, %v305
    %v317 = vadd.f32 %v289, %v309
    %v318 = vadd.f32 %v290, %v305
    %v319 = vadd.f32 %v291, %v309
    %v320 = vadd.f32 %v292, %v305
    %v321 = vadd.f32 %v293, %v309
    %v322 = vadd.f32 %v294, %v305
    %v323 = vadd.f32 %v295, %v309
    %v324 = vadd.f32 %v296, %v305
    %v325 = vadd.f32 %v297, %v309
    %v326 = vadd.f32 %v298, %v305
    %v327 = vadd.f32 %v299, %v309
    %v328 = vmax.f32 %v312, 0.0
    %v329 = vmax.f32 %v313, 0.0
    %v330 = vmax.f32 %v314, 0.0
    %v331 = vmax.f32 %v315, 0.0
    %v332 = vmax.f32 %v316, 0.0
    %v333 = vmax.f32 %v317, 0.0
    %v334 = vmax.f32 %v318, 0.0
    %v335 = vmax.f32 %v319, 0.0
    %v336 = vmax.f32 %v320, 0.0
    %v337 = vmax.f32 %v321, 0.0
    %v338 = vmax.f32 %v322, 0.0
    %v339 = vmax.f32 %v323, 0.0
    %v340 = vmax.f32 %v324, 0.0
    %v341 = vmax.f32 %v325, 0.0
    %v342 = vmax.f32 %v326, 0.0
    %v343 = vmax.f32 %v327, 0.0
    %v344 = vld [vmem:[#allocation8] sm:$0xff]
    %v345 = vld [vmem:[#allocation8 + $0x8] sm:$0xff]
    %v346 = vld [vmem:[#allocation8 + $0x10] sm:$0xff]
    %v347 = vld [vmem:[#allocation8 + $0x18] sm:$0xff]
    %v348 = vld [vmem:[#allocation8 + $0x20] sm:$0xff]
    %v349 = vld [vmem:[#allocation8 + $0x28] sm:$0xff]
    %v350 = vld [vmem:[#allocation8 + $0x30] sm:$0xff]
    %v351 = vld [vmem:[#allocation8 + $0x38] sm:$0xff]
    %v352 = vld [vmem:[#allocation8 + $0x40] sm:$0xff]
    %v353 = vld [vmem:[#allocation8 + $0x48] sm:$0xff]
    %v354 = vld [vmem:[#allocation8 + $0x50] sm:$0xff]
    %v355 = vld [vmem:[#allocation8 + $0x58] sm:$0xff]
    %v356 = vld [vmem:[#allocation8 + $0x60] sm:$0xff]
    %v357 = vld [vmem:[#allocation8 + $0x68] sm:$0xff]
    %v358 = vld [vmem:[#allocation8 + $0x70] sm:$0xff]
    %v359 = vld [vmem:[#allocation8 + $0x78] sm:$0xff]
    %v360 = vld [vmem:[#allocation8 + $0x80] sm:$0xff]
    %v361 = vld [vmem:[#allocation8 + $0x88] sm:$0xff]
    %v362 = vld [vmem:[#allocation8 + $0x90] sm:$0xff]
    %v363 = vld [vmem:[#allocation8 + $0x98] sm:$0xff]
    %v364 = vld [vmem:[#allocation8 + $0xa0] sm:$0xff]
    %v365 = vld [vmem:[#allocation8 + $0xa8] sm:$0xff]
    %v366 = vld [vmem:[#allocation8 + $0xb0] sm:$0xff]
    %v367 = vld [vmem:[#allocation8 + $0xb8] sm:$0xff]
    %v368 = vld [vmem:[#allocation8 + $0xc0] sm:$0xff]
    %v369 = vld [vmem:[#allocation8 + $0xc8] sm:$0xff]
    %v370 = vld [vmem:[#allocation8 + $0xd0] sm:$0xff]
    %v371 = vld [vmem:[#allocation8 + $0xd8] sm:$0xff]
    %v372 = vld [vmem:[#allocation8 + $0xe0] sm:$0xff]
    %v373 = vld [vmem:[#allocation8 + $0xe8] sm:$0xff]
    %v374 = vld [vmem:[#allocation8 + $0xf0] sm:$0xff]
    %v375 = vld [vmem:[#allocation8 + $0xf8] sm:$0xff]
    %376 = vmatprep.subr.mxu0 0.0
    %377 = vmatpush1.msra.mxu0 %v344
    %378 = vmatprep.subr.mxu0 0.0
    %379 = vmatpush1.msra.mxu0 %v345
    %380 = vmatprep.subr.mxu0 0.0
    %381 = vmatpush1.msra.mxu0 %v346
    %382 = vmatprep.subr.mxu0 0.0
    %383 = vmatpush1.msra.mxu0 %v347
    %384 = vmatprep.subr.mxu0 0.0
    %385 = vmatpush1.msra.mxu0 %v348
    %386 = vmatprep.subr.mxu0 0.0
    %387 = vmatpush1.msra.mxu0 %v349
    %388 = vmatprep.subr.mxu0 0.0
    %389 = vmatpush1.msra.mxu0 %v350
    %390 = vmatprep.subr.mxu0 0.0
    %391 = vmatpush1.msra.mxu0 %v351
    %392 = vmatprep.subr.mxu0 0.0
    %393 = vmatpush1.msra.mxu0 %v352
    %394 = vmatprep.subr.mxu0 0.0
    %395 = vmatpush1.msra.mxu0 %v353
    %396 = vmatprep.subr.mxu0 0.0
    %397 = vmatpush1.msra.mxu0 %v354
    %398 = vmatprep.subr.mxu0 0.0
    %399 = vmatpush1.msra.mxu0 %v355
    %400 = vmatprep.subr.mxu0 0.0
    %401 = vmatpush1.msra.mxu0 %v356
    %402 = vmatprep.subr.mxu0 0.0
    %403 = vmatpush1.msra.mxu0 %v357
    %404 = vmatprep.subr.mxu0 0.0
    %405 = vmatpush1.msra.mxu0 %v358
    %406 = vmatprep.subr.mxu0 0.0
    %407 = vmatpush1.msra.mxu0 %v359
    %408 = vmatprep.subr.mxu0 0.0
    %409 = vmatpush1.msra.mxu0 %v360
    %410 = vmatprep.subr.mxu0 0.0
    %411 = vmatpush1.msra.mxu0 %v361
    %412 = vmatprep.subr.mxu0 0.0
    %413 = vmatpush1.msra.mxu0 %v362
    %414 = vmatprep.subr.mxu0 0.0
    %415 = vmatpush1.msra.mxu0 %v363
    %416 = vmatprep.subr.mxu0 0.0
    %417 = vmatpush1.msra.mxu0 %v364
    %418 = vmatprep.subr.mxu0 0.0
    %419 = vmatpush1.msra.mxu0 %v365
    %420 = vmatprep.subr.mxu0 0.0
    %421 = vmatpush1.msra.mxu0 %v366
    %422 = vmatprep.subr.mxu0 0.0
    %423 = vmatpush1.msra.mxu0 %v367
    %424 = vmatprep.subr.mxu0 0.0
    %425 = vmatpush1.msra.mxu0 %v368
    %426 = vmatprep.subr.mxu0 0.0
    %427 = vmatpush1.msra.mxu0 %v369
    %428 = vmatprep.subr.mxu0 0.0
    %429 = vmatpush1.msra.mxu0 %v370
    %430 = vmatprep.subr.mxu0 0.0
    %431 = vmatpush1.msra.mxu0 %v371
    %432 = vmatprep.subr.mxu0 0.0
    %433 = vmatpush1.msra.mxu0 %v372
    %434 = vmatprep.subr.mxu0 0.0
    %435 = vmatpush1.msra.mxu0 %v373
    %436 = vmatprep.subr.mxu0 0.0
    %437 = vmatpush1.msra.mxu0 %v374
    %438 = vmatprep.subr.mxu0 0.0
    %439 = vmatpush1.msra.mxu0 %v375
    %440 = vmatprep.mubr.f32.mxu0 %v329
    %441 = vmatmul.mubr.f32.gmra.mrb[0].mxu0 %v328
    %v442 = vpop.f32.mrb[0].mxu0
    %v443 = vadd.f32 0.0, %v442
    %v444 = vpop.f32.mrb[0].mxu0
    %445 = vmatprep.mubr.f32.mxu0 %v331
    %446 = vmatmul.mubr.f32.gmra.mrb[0].mxu0 %v330
    %v447 = vpop.f32.mrb[0].mxu0
    %v448 = vadd.f32 0.0, %v447
    %v449 = vpop.f32.mrb[0].mxu0
    %450 = vmatprep.mubr.f32.mxu0 %v333
    %451 = vmatmul.mubr.f32.gmra.mrb[0].mxu0 %v332
    %v452 = vpop.f32.mrb[0].mxu0
    %v453 = vadd.f32 0.0, %v452
    %v454 = vpop.f32.mrb[0].mxu0
    %455 = vmatprep.mubr.f32.mxu0 %v335
    %456 = vmatmul.mubr.f32.gmra.mrb[0].mxu0 %v334
    %v457 = vpop.f32.mrb[0].mxu0
    %v458 = vadd.f32 0.0, %v457
    %v459 = vpop.f32.mrb[0].mxu0
    %460 = vmatprep.mubr.f32.mxu0 %v337
    %461 = vmatmul.mubr.f32.gmra.mrb[0].mxu0 %v336
    %v462 = vpop.f32.mrb[0].mxu0
    %v463 = vadd.f32 0.0, %v462
    %v464 = vpop.f32.mrb[0].mxu0
    %465 = vmatprep.mubr.f32.mxu0 %v339
    %466 = vmatmul.mubr.f32.gmra.mrb[0].mxu0 %v338
    %v467 = vpop.f32.mrb[0].mxu0
    %v468 = vadd.f32 0.0, %v467
    %v469 = vpop.f32.mrb[0].mxu0
    %470 = vmatprep.mubr.f32.mxu0 %v341
    %471 = vmatmul.mubr.f32.gmra.mrb[0].mxu0 %v340
    %v472 = vpop.f32.mrb[0].mxu0
    %v473 = vadd.f32 0.0, %v472
    %v474 = vpop.f32.mrb[0].mxu0
    %475 = vmatprep.mubr.f32.mxu0 %v343
    %476 = vmatmul.mubr.f32.gmra.mrb[0].mxu0 %v342
    %v477 = vpop.f32.mrb[0].mxu0
    %v478 = vadd.f32 0.0, %v477
    %v479 = vpop.f32.mrb[0].mxu0
    %480 = vdwg.mxu0
    %v481 = vld [vmem:[#allocation9] sm:$0x1]
    %v483 = vlaneseq
    %v484 = vshrl.u32 %v483, 7
    %v485 = vsub.s32 0, %v484
    %v486 = vrot.slane %v481, %v485
    %v488 = vmul.f32 %v443, %v486
    %v489 = vmul.f32 %v448, %v486
    %v490 = vmul.f32 %v453, %v486
    %v491 = vmul.f32 %v458, %v486
    %v492 = vmul.f32 %v463, %v486
    %v493 = vmul.f32 %v468, %v486
    %v494 = vmul.f32 %v473, %v486
    %v495 = vmul.f32 %v478, %v486
    %v496 = vld [vmem:[#allocation11] sm:$0x1]
    %v498 = vlaneseq
    %v499 = vshrl.u32 %v498, 7
    %v500 = vsub.s32 0, %v499
    %v501 = vrot.slane %v496, %v500
    %v503 = vadd.f32 %v488, %v501
    %v504 = vadd.f32 %v489, %v501
    %v505 = vadd.f32 %v490, %v501
    %v506 = vadd.f32 %v491, %v501
    %v507 = vadd.f32 %v492, %v501
    %v508 = vadd.f32 %v493, %v501
    %v509 = vadd.f32 %v494, %v501
    %v510 = vadd.f32 %v495, %v501
    %v511 = vmax.f32 %v503, 0.0
    %v512 = vmax.f32 %v504, 0.0
    %v513 = vmax.f32 %v505, 0.0
    %v514 = vmax.f32 %v506, 0.0
    %v515 = vmax.f32 %v507, 0.0
    %v516 = vmax.f32 %v508, 0.0
    %v517 = vmax.f32 %v509, 0.0
    %v518 = vmax.f32 %v510, 0.0
    %v519 = vld [vmem:[%s7] sm:$0xff]
    %v520 = vld [vmem:[%s7 + $0x8] sm:$0xff]
    %v521 = vld [vmem:[%s7 + $0x10] sm:$0xff]
    %v522 = vld [vmem:[%s7 + $0x18] sm:$0xff]
    %v523 = vld [vmem:[%s7 + $0x20] sm:$0xff]
    %v524 = vld [vmem:[%s7 + $0x28] sm:$0xff]
    %v525 = vld [vmem:[%s7 + $0x30] sm:$0xff]
    %v526 = vld [vmem:[%s7 + $0x38] sm:$0xff]
    %v527 = vld [vmem:[%s7 + $0x40] sm:$0xff]
    %v528 = vld [vmem:[%s7 + $0x48] sm:$0xff]
    %v529 = vld [vmem:[%s7 + $0x50] sm:$0xff]
    %v530 = vld [vmem:[%s7 + $0x58] sm:$0xff]
    %v531 = vld [vmem:[%s7 + $0x60] sm:$0xff]
    %v532 = vld [vmem:[%s7 + $0x68] sm:$0xff]
    %v533 = vld [vmem:[%s7 + $0x70] sm:$0xff]
    %v534 = vld [vmem:[%s7 + $0x78] sm:$0xff]
    %535 = vmatprep.subr.mxu0 0.0
    %536 = vmatpush1.msra.mxu0 %v519
    %537 = vmatprep.subr.mxu0 0.0
    %538 = vmatpush1.msra.mxu0 %v520
    %539 = vmatprep.subr.mxu0 0.0
    %540 = vmatpush1.msra.mxu0 %v521
    %541 = vmatprep.subr.mxu0 0.0
    %542 = vmatpush1.msra.mxu0 %v522
    %543 = vmatprep.subr.mxu0 0.0
    %544 = vmatpush1.msra.mxu0 %v523
    %545 = vmatprep.subr.mxu0 0.0
    %546 = vmatpush1.msra.mxu0 %v524
    %547 = vmatprep.subr.mxu0 0.0
    %548 = vmatpush1.msra.mxu0 %v525
    %549 = vmatprep.subr.mxu0 0.0
    %550 = vmatpush1.msra.mxu0 %v526
    %551 = vmatprep.subr.mxu0 0.0
    %552 = vmatpush1.msra.mxu0 %v527
    %553 = vmatprep.subr.mxu0 0.0
    %554 = vmatpush1.msra.mxu0 %v528
    %555 = vmatprep.subr.mxu0 0.0
    %556 = vmatpush1.msra.mxu0 %v529
    %557 = vmatprep.subr.mxu0 0.0
    %558 = vmatpush1.msra.mxu0 %v530
    %559 = vmatprep.subr.mxu0 0.0
    %560 = vmatpush1.msra.mxu0 %v531
    %561 = vmatprep.subr.mxu0 0.0
    %562 = vmatpush1.msra.mxu0 %v532
    %563 = vmatprep.subr.mxu0 0.0
    %564 = vmatpush1.msra.mxu0 %v533
    %565 = vmatprep.subr.mxu0 0.0
    %566 = vmatpush1.msra.mxu0 %v534
    %567 = vmatprep.subr.mxu0 0.0
    %568 = vmatpush1.msra.mxu0 0.0
    %569 = vmatprep.subr.mxu0 0.0
    %570 = vmatpush1.msra.mxu0 0.0
    %571 = vmatprep.subr.mxu0 0.0
    %572 = vmatpush1.msra.mxu0 0.0
    %573 = vmatprep.subr.mxu0 0.0
    %574 = vmatpush1.msra.mxu0 0.0
    %575 = vmatprep.subr.mxu0 0.0
    %576 = vmatpush1.msra.mxu0 0.0
    %577 = vmatprep.subr.mxu0 0.0
    %578 = vmatpush1.msra.mxu0 0.0
    %579 = vmatprep.subr.mxu0 0.0
    %580 = vmatpush1.msra.mxu0 0.0
    %581 = vmatprep.subr.mxu0 0.0
    %582 = vmatpush1.msra.mxu0 0.0
    %583 = vmatprep.subr.mxu0 0.0
    %584 = vmatpush1.msra.mxu0 0.0
    %585 = vmatprep.subr.mxu0 0.0
    %586 = vmatpush1.msra.mxu0 0.0
    %587 = vmatprep.subr.mxu0 0.0
    %588 = vmatpush1.msra.mxu0 0.0
    %589 = vmatprep.subr.mxu0 0.0
    %590 = vmatpush1.msra.mxu0 0.0
    %591 = vmatprep.subr.mxu0 0.0
    %592 = vmatpush1.msra.mxu0 0.0
    %593 = vmatprep.subr.mxu0 0.0
    %594 = vmatpush1.msra.mxu0 0.0
    %595 = vmatprep.subr.mxu0 0.0
    %596 = vmatpush1.msra.mxu0 0.0
    %597 = vmatprep.subr.mxu0 0.0
    %598 = vmatpush1.msra.mxu0 0.0
    %599 = vmatprep.mubr.f32.mxu0 0.0
    %600 = vmatmul.mubr.f32.gmra.mrb[0].mxu0 %v511
    %v601 = vpop.f32.mrb[0].mxu0
    %v602 = vadd.f32 0.0, %v601
    %v603 = vpop.f32.mrb[0].mxu0
    %604 = vmatprep.mubr.f32.mxu0 0.0
    %605 = vmatmul.mubr.f32.gmra.mrb[0].mxu0 %v512
    %v606 = vpop.f32.mrb[0].mxu0
    %v607 = vadd.f32 0.0, %v606
    %v608 = vpop.f32.mrb[0].mxu0
    %609 = vmatprep.mubr.f32.mxu0 0.0
    %610 = vmatmul.mubr.f32.gmra.mrb[0].mxu0 %v513
    %v611 = vpop.f32.mrb[0].mxu0
    %v612 = vadd.f32 0.0, %v611
    %v613 = vpop.f32.mrb[0].mxu0
    %614 = vmatprep.mubr.f32.mxu0 0.0
    %615 = vmatmul.mubr.f32.gmra.mrb[0].mxu0 %v514
    %v616 = vpop.f32.mrb[0].mxu0
    %v617 = vadd.f32 0.0, %v616
    %v618 = vpop.f32.mrb[0].mxu0
    %619 = vmatprep.mubr.f32.mxu0 0.0
    %620 = vmatmul.mubr.f32.gmra.mrb[0].mxu0 %v515
    %v621 = vpop.f32.mrb[0].mxu0
    %v622 = vadd.f32 0.0, %v621
    %v623 = vpop.f32.mrb[0].mxu0
    %624 = vmatprep.mubr.f32.mxu0 0.0
    %625 = vmatmul.mubr.f32.gmra.mrb[0].mxu0 %v516
    %v626 = vpop.f32.mrb[0].mxu0
    %v627 = vadd.f32 0.0, %v626
    %v628 = vpop.f32.mrb[0].mxu0
    %629 = vmatprep.mubr.f32.mxu0 0.0
    %630 = vmatmul.mubr.f32.gmra.mrb[0].mxu0 %v517
    %v631 = vpop.f32.mrb[0].mxu0
    %v632 = vadd.f32 0.0, %v631
    %v633 = vpop.f32.mrb[0].mxu0
    %634 = vmatprep.mubr.f32.mxu0 0.0
    %635 = vmatmul.mubr.f32.gmra.mrb[0].mxu0 %v518
    %v636 = vpop.f32.mrb[0].mxu0
    %v637 = vadd.f32 0.0, %v636
    %v638 = vpop.f32.mrb[0].mxu0
    %639 = vdwg.mxu0
    %v640 = vld [vmem:[%s8] sm:$0x1]
    %v642 = vlaneseq
    %v643 = vshrl.u32 %v642, 7
    %v644 = vsub.s32 0, %v643
    %v645 = vrot.slane %v640, %v644
    %v647 = vmul.f32 %v602, %v645
    %v648 = vmul.f32 %v607, %v645
    %v649 = vmul.f32 %v612, %v645
    %v650 = vmul.f32 %v617, %v645
    %v651 = vmul.f32 %v622, %v645
    %v652 = vmul.f32 %v627, %v645
    %v653 = vmul.f32 %v632, %v645
    %v654 = vmul.f32 %v637, %v645
    %v655 = vld [vmem:[%s9] sm:$0x1]
    %v657 = vlaneseq
    %v658 = vshrl.u32 %v657, 7
    %v659 = vsub.s32 0, %v658
    %v660 = vrot.slane %v655, %v659
    %v662 = vadd.f32 %v647, %v660
    %v663 = vadd.f32 %v648, %v660
    %v664 = vadd.f32 %v649, %v660
    %v665 = vadd.f32 %v650, %v660
    %v666 = vadd.f32 %v651, %v660
    %v667 = vadd.f32 %v652, %v660
    %v668 = vadd.f32 %v653, %v660
    %v669 = vadd.f32 %v654, %v660
    %v670 = vmax.f32 %v662, 0.0
    %v671 = vmax.f32 %v663, 0.0
    %v672 = vmax.f32 %v664, 0.0
    %v673 = vmax.f32 %v665, 0.0
    %v674 = vmax.f32 %v666, 0.0
    %v675 = vmax.f32 %v667, 0.0
    %v676 = vmax.f32 %v668, 0.0
    %v677 = vmax.f32 %v669, 0.0
    %v678 = vld [vmem:[%s10] sm:$0xff]
    %v679 = vld [vmem:[%s10 + $0x8] sm:$0xff]
    %v680 = vld [vmem:[%s10 + $0x10] sm:$0xff]
    %v681 = vld [vmem:[%s10 + $0x18] sm:$0xff]
    %v682 = vld [vmem:[%s10 + $0x20] sm:$0xff]
    %v683 = vld [vmem:[%s10 + $0x28] sm:$0xff]
    %v684 = vld [vmem:[%s10 + $0x30] sm:$0xff]
    %v685 = vld [vmem:[%s10 + $0x38] sm:$0xff]
    %vm686 = vcmask 523264
    %v688 = vsel %vm686, %v670, 0
    %v691 = vsel %vm686, %v671, 0
    %v694 = vsel %vm686, %v672, 0
    %v697 = vsel %vm686, %v673, 0
    %v700 = vsel %vm686, %v674, 0
    %v703 = vsel %vm686, %v675, 0
    %v706 = vsel %vm686, %v676, 0
    %v709 = vsel %vm686, %v677, 0
    %711 = vmatprep.subr.mxu0 0.0
    %712 = vmatpush1.msra.mxu0 %v678
    %713 = vmatprep.subr.mxu0 0.0
    %714 = vmatpush1.msra.mxu0 %v679
    %715 = vmatprep.subr.mxu0 0.0
    %716 = vmatpush1.msra.mxu0 %v680
    %717 = vmatprep.subr.mxu0 0.0
    %718 = vmatpush1.msra.mxu0 %v681
    %719 = vmatprep.subr.mxu0 0.0
    %720 = vmatpush1.msra.mxu0 %v682
    %721 = vmatprep.subr.mxu0 0.0
    %722 = vmatpush1.msra.mxu0 %v683
    %723 = vmatprep.subr.mxu0 0.0
    %724 = vmatpush1.msra.mxu0 %v684
    %725 = vmatprep.subr.mxu0 0.0
    %726 = vmatpush1.msra.mxu0 %v685
    %727 = vmatprep.subr.mxu0 0.0
    %728 = vmatpush1.msra.mxu0 0.0
    %729 = vmatprep.subr.mxu0 0.0
    %730 = vmatpush1.msra.mxu0 0.0
    %731 = vmatprep.subr.mxu0 0.0
    %732 = vmatpush1.msra.mxu0 0.0
    %733 = vmatprep.subr.mxu0 0.0
    %734 = vmatpush1.msra.mxu0 0.0
    %735 = vmatprep.subr.mxu0 0.0
    %736 = vmatpush1.msra.mxu0 0.0
    %737 = vmatprep.subr.mxu0 0.0
    %738 = vmatpush1.msra.mxu0 0.0
    %739 = vmatprep.subr.mxu0 0.0
    %740 = vmatpush1.msra.mxu0 0.0
    %741 = vmatprep.subr.mxu0 0.0
    %742 = vmatpush1.msra.mxu0 0.0
    %743 = vmatprep.subr.mxu0 0.0
    %744 = vmatpush1.msra.mxu0 0.0
    %745 = vmatprep.subr.mxu0 0.0
    %746 = vmatpush1.msra.mxu0 0.0
    %747 = vmatprep.subr.mxu0 0.0
    %748 = vmatpush1.msra.mxu0 0.0
    %749 = vmatprep.subr.mxu0 0.0
    %750 = vmatpush1.msra.mxu0 0.0
    %751 = vmatprep.subr.mxu0 0.0
    %752 = vmatpush1.msra.mxu0 0.0
    %753 = vmatprep.subr.mxu0 0.0
    %754 = vmatpush1.msra.mxu0 0.0
    %755 = vmatprep.subr.mxu0 0.0
    %756 = vmatpush1.msra.mxu0 0.0
    %757 = vmatprep.subr.mxu0 0.0
    %758 = vmatpush1.msra.mxu0 0.0
    %759 = vmatprep.subr.mxu0 0.0
    %760 = vmatpush1.msra.mxu0 0.0
    %761 = vmatprep.subr.mxu0 0.0
    %762 = vmatpush1.msra.mxu0 0.0
    %763 = vmatprep.subr.mxu0 0.0
    %764 = vmatpush1.msra.mxu0 0.0
    %765 = vmatprep.subr.mxu0 0.0
    %766 = vmatpush1.msra.mxu0 0.0
    %767 = vmatprep.subr.mxu0 0.0
    %768 = vmatpush1.msra.mxu0 0.0
    %769 = vmatprep.subr.mxu0 0.0
    %770 = vmatpush1.msra.mxu0 0.0
    %771 = vmatprep.subr.mxu0 0.0
    %772 = vmatpush1.msra.mxu0 0.0
    %773 = vmatprep.subr.mxu0 0.0
    %774 = vmatpush1.msra.mxu0 0.0
    %775 = vmatprep.mubr.f32.mxu0 0.0
    %776 = vmatmul.mubr.f32.gmra.mrb[0].mxu0 %v688
    %v777 = vpop.f32.mrb[0].mxu0
    %v778 = vadd.f32 0.0, %v777
    %v779 = vpop.f32.mrb[0].mxu0
    %780 = vmatprep.mubr.f32.mxu0 0.0
    %781 = vmatmul.mubr.f32.gmra.mrb[0].mxu0 %v691
    %v782 = vpop.f32.mrb[0].mxu0
    %v783 = vadd.f32 0.0, %v782
    %v784 = vpop.f32.mrb[0].mxu0
    %785 = vmatprep.mubr.f32.mxu0 0.0
    %786 = vmatmul.mubr.f32.gmra.mrb[0].mxu0 %v694
    %v787 = vpop.f32.mrb[0].mxu0
    %v788 = vadd.f32 0.0, %v787
    %v789 = vpop.f32.mrb[0].mxu0
    %790 = vmatprep.mubr.f32.mxu0 0.0
    %791 = vmatmul.mubr.f32.gmra.mrb[0].mxu0 %v697
    %v792 = vpop.f32.mrb[0].mxu0
    %v793 = vadd.f32 0.0, %v792
    %v794 = vpop.f32.mrb[0].mxu0
    %795 = vmatprep.mubr.f32.mxu0 0.0
    %796 = vmatmul.mubr.f32.gmra.mrb[0].mxu0 %v700
    %v797 = vpop.f32.mrb[0].mxu0
    %v798 = vadd.f32 0.0, %v797
    %v799 = vpop.f32.mrb[0].mxu0
    %800 = vmatprep.mubr.f32.mxu0 0.0
    %801 = vmatmul.mubr.f32.gmra.mrb[0].mxu0 %v703
    %v802 = vpop.f32.mrb[0].mxu0
    %v803 = vadd.f32 0.0, %v802
    %v804 = vpop.f32.mrb[0].mxu0
    %805 = vmatprep.mubr.f32.mxu0 0.0
    %806 = vmatmul.mubr.f32.gmra.mrb[0].mxu0 %v706
    %v807 = vpop.f32.mrb[0].mxu0
    %v808 = vadd.f32 0.0, %v807
    %v809 = vpop.f32.mrb[0].mxu0
    %810 = vmatprep.mubr.f32.mxu0 0.0
    %811 = vmatmul.mubr.f32.gmra.mrb[0].mxu0 %v709
    %v812 = vpop.f32.mrb[0].mxu0
    %v813 = vadd.f32 0.0, %v812
    %v814 = vpop.f32.mrb[0].mxu0
    %815 = vdwg.mxu0
    %v816 = vld [vmem:[%s11] sm:$0x1]
    %v818 = vlaneseq
    %v819 = vshrl.u32 %v818, 7
    %v820 = vsub.s32 0, %v819
    %v821 = vrot.slane %v816, %v820
    %v823 = vmul.f32 %v778, %v821
    %v824 = vmul.f32 %v783, %v821
    %v825 = vmul.f32 %v788, %v821
    %v826 = vmul.f32 %v793, %v821
    %v827 = vmul.f32 %v798, %v821
    %v828 = vmul.f32 %v803, %v821
    %v829 = vmul.f32 %v808, %v821
    %v830 = vmul.f32 %v813, %v821
    %v831 = vld [vmem:[%s12] sm:$0x1]
    %v833 = vlaneseq
    %v834 = vshrl.u32 %v833, 7
    %v835 = vsub.s32 0, %v834
    %v836 = vrot.slane %v831, %v835
    %v838 = vadd.f32 %v823, %v836
    %v839 = vadd.f32 %v824, %v836
    %v840 = vadd.f32 %v825, %v836
    %v841 = vadd.f32 %v826, %v836
    %v842 = vadd.f32 %v827, %v836
    %v843 = vadd.f32 %v828, %v836
    %v844 = vadd.f32 %v829, %v836
    %v845 = vadd.f32 %v830, %v836
    %v846 = vmax.f32 %v838, 0.0
    %v847 = vmax.f32 %v839, 0.0
    %v848 = vmax.f32 %v840, 0.0
    %v849 = vmax.f32 %v841, 0.0
    %v850 = vmax.f32 %v842, 0.0
    %v851 = vmax.f32 %v843, 0.0
    %v852 = vmax.f32 %v844, 0.0
    %v853 = vmax.f32 %v845, 0.0
    %v854 = vld [vmem:[%s13] sm:$0x1]
    %v856 = vlaneseq
    %v857 = vshrl.u32 %v856, 7
    %v858 = vsub.s32 0, %v857
    %v859 = vrot.slane %v854, %v858
    %v861 = vmul.f32 %v846, %v859
    %v862 = vmul.f32 %v847, %v859
    %v863 = vmul.f32 %v848, %v859
    %v864 = vmul.f32 %v849, %v859
    %v865 = vmul.f32 %v850, %v859
    %v866 = vmul.f32 %v851, %v859
    %v867 = vmul.f32 %v852, %v859
    %v868 = vmul.f32 %v853, %v859
    %vm869 = vcmask 261120
    %v870 = vsel %vm869, %v861, 0.0
    %871 = vadd.xlane.f32.xlu0 %v870
    %v872 = vpop.xlane.xlu0 %871
    %v873 = vsel %vm869, %v862, 0.0
    %874 = vadd.xlane.f32.xlu0 %v873
    %v875 = vpop.xlane.xlu0 %874
    %v876 = vsel %vm869, %v863, 0.0
    %877 = vadd.xlane.f32.xlu0 %v876
    %v878 = vpop.xlane.xlu0 %877
    %v879 = vsel %vm869, %v864, 0.0
    %880 = vadd.xlane.f32.xlu0 %v879
    %v881 = vpop.xlane.xlu0 %880
    %v882 = vsel %vm869, %v865, 0.0
    %883 = vadd.xlane.f32.xlu0 %v882
    %v884 = vpop.xlane.xlu0 %883
    %v885 = vsel %vm869, %v866, 0.0
    %886 = vadd.xlane.f32.xlu0 %v885
    %v887 = vpop.xlane.xlu0 %886
    %v888 = vsel %vm869, %v867, 0.0
    %889 = vadd.xlane.f32.xlu0 %v888
    %v890 = vpop.xlane.xlu0 %889
    %v891 = vsel %vm869, %v868, 0.0
    %892 = vadd.xlane.f32.xlu0 %v891
    %v893 = vpop.xlane.xlu0 %892
    %v894 = vld [vmem:[#allocation2] sm:$0x1]
    %v896 = vlaneseq
    %v897 = vshrl.u32 %v896, 7
    %v898 = vsub.s32 0, %v897
    %v899 = vrot.slane %v894, %v898
    %v901 = vmul.f32 %v872, %v899
    %v902 = vmul.f32 %v875, %v899
    %v903 = vmul.f32 %v878, %v899
    %v904 = vmul.f32 %v881, %v899
    %v905 = vmul.f32 %v884, %v899
    %v906 = vmul.f32 %v887, %v899
    %v907 = vmul.f32 %v890, %v899
    %v908 = vmul.f32 %v893, %v899
    %v909 = vld [vmem:[#allocation3] sm:$0x1]
    %v911 = vlaneseq
    %v912 = vshrl.u32 %v911, 7
    %v913 = vsub.s32 0, %v912
    %v914 = vrot.slane %v909, %v913
    %v916 = vadd.f32 %v901, %v914
    %v917 = vadd.f32 %v902, %v914
    %v918 = vadd.f32 %v903, %v914
    %v919 = vadd.f32 %v904, %v914
    %v920 = vadd.f32 %v905, %v914
    %v921 = vadd.f32 %v906, %v914
    %v922 = vadd.f32 %v907, %v914
    %v923 = vadd.f32 %v908, %v914
    %vm924 = vcmask 7168
    %925 = vst.msk [vmem:[%s16] sm:$0xff] %vm924, %v916
    %926 = vst.msk [vmem:[%s16 + $0x8] sm:$0xff] %vm924, %v917
    %927 = vst.msk [vmem:[%s16 + $0x10] sm:$0xff] %vm924, %v918
    %928 = vst.msk [vmem:[%s16 + $0x18] sm:$0xff] %vm924, %v919
    %929 = vst.msk [vmem:[%s16 + $0x20] sm:$0xff] %vm924, %v920
    %930 = vst.msk [vmem:[%s16 + $0x28] sm:$0xff] %vm924, %v921
    %931 = vst.msk [vmem:[%s16 + $0x30] sm:$0xff] %vm924, %v922
    %932 = vst.msk [vmem:[%s16 + $0x38] sm:$0xff] %vm924, %v923
    // Predicated region
    $region86: #{tpu_custom_call.1} parent=1 // pred_check
      _
    $region87: #{tpu_custom_call.1} parent=1 // pred_check_branch
      %934 = sbr.rel (0) target = $region89
    $region88: #{tpu_custom_call.1} parent=1 // pred_region
      _
    $region89: #{tpu_custom_call.1} parent=1 // pred_fallthru
      _
    // Predicated region
    $region90: #{tpu_custom_call.1} parent=1 // pred_check
      _
    $region91: #{tpu_custom_call.1} parent=1 // pred_check_branch
      %936 = sbr.rel (0) target = $region93
    $region92: #{tpu_custom_call.1} parent=1 // pred_region
      _
    $region93: #{tpu_custom_call.1} parent=1 // pred_fallthru
      _
    %937 = vsyncpa [#allocation5], 1
    %938 = vsyncpa [#allocation7], 1
    %939 = vsyncpa [#allocation10], 1

</llo_original>
